<compile_context>
chip_gen: v7x
topology: tpu7x:2x2x1
jax: 0.10.0
libtpu: 0.0.40
codegen_flags: <defaults>
</compile_context>

<pallas_src>
import functools

import jax
import jax.numpy as jnp
from jax import lax
from jax.experimental import pallas as pl
from jax.experimental.pallas import tpu as pltpu

ALPHA = 0.25   # deterministic "parameter" init, matches nn.Module default
GAMMA = 2

_LANES = 128
_BLOCK_BYTES = 2 * 1024 * 1024        # per-input per-block chunk (sweep 2-4 MiB)
_VMEM_LIMIT = 32 * 1024 * 1024        # 2 in x 2 buf x block + headroom, all gens
_MAX_CORES = 2                        # leading parallel axis (v7x TC split)


def _focal_kernel(x_ref, t_ref, o_ref, acc_ref, *, alpha, gamma, tile_rows,
                  blocks_per_core, n_blocks, last_rows, has_extra):
    p = pl.program_id(0)
    i = pl.program_id(1)
    blk = p * blocks_per_core + i       # logical block id (may exceed n_blocks-1
                                        # by 1 on the clamped "extra" iteration)

    @pl.when(i == 0)
    def _():
        acc_ref[...] = jnp.zeros_like(acc_ref)

    x = x_ref[...].astype(jnp.float32)
    t = t_ref[...].astype(jnp.float32)

    # binary_cross_entropy_with_logits, reduction='none'
    e = jnp.exp(-jnp.abs(x))                       # single EUP exp per element
    r = jnp.maximum(x, 0.0) - x * t                # "relu" part of the BCE
    bce = r + jnp.log1p(e)

    # at = alpha_vec[targets.long()], alpha_vec = [alpha, 1-alpha]
    at = jnp.where(t == 0.0, jnp.float32(alpha), jnp.float32(1.0 - alpha))

    # pt = exp(-bce) = exp(-r) / (1 + e); for binary t, exp(-r) is e or 1,
    # so no second transcendental.  Approx reciprocal -> EUP only, no Newton.
    num = jnp.where(r > 0.0, e, jnp.float32(1.0))
    pt = num * pl.reciprocal(1.0 + e, approx=True)

    omp = 1.0 - pt
    mod = omp * omp if gamma == 2 else omp ** gamma
    f_loss = at * mod * bce

    def _accumulate(valid_rows):
        f = f_loss
        if valid_rows is not None:
            # Mask rows past the end of the array (ragged boundary block).
            row = lax.broadcasted_iota(jnp.int32, f.shape, 0)
            f = jnp.where(row < valid_rows, f, 0.0)
        # Fold the tile's 8-row groups with pure VPU adds; defer cross-sublane
        # reduction to the epilogue.
        acc_ref[...] += f.reshape(tile_rows // 8, 8, _LANES).sum(axis=0)

    ragged = last_rows != tile_rows
    if not ragged and not has_extra:
        _accumulate(None)                           # fast path: no masking ops
    else:
        @pl.when(blk < n_blocks - 1)
        def _():
            _accumulate(None)                       # interior blocks: unmasked

        @pl.when(blk == n_blocks - 1)
        def _():
            _accumulate(last_rows if ragged else None)
        # blk >= n_blocks (the clamped duplicate block) falls through: skipped.

    @pl.when(i == pl.num_programs(1) - 1)
    def _():
        o_ref[...] = jnp.sum(acc_ref[...], axis=0, keepdims=True)


def _focal_sum_jnp(x, t, alpha, gamma):
    """Plain-jnp focal-loss SUM (used for the tiny ragged lane tail)."""
    x = x.astype(jnp.float32)
    t = t.astype(jnp.float32)
    bce = jnp.maximum(x, 0.0) - x * t + jnp.log1p(jnp.exp(-jnp.abs(x)))
    at = jnp.where(t == 0.0, jnp.float32(alpha), jnp.float32(1.0 - alpha))
    pt = jnp.exp(-bce)
    return jnp.sum(at * (1.0 - pt) ** gamma * bce)


def weighted_focal_loss(inputs, targets, alpha=ALPHA, gamma=GAMMA,
                        block_bytes=_BLOCK_BYTES):
    """inputs, targets: any (matching) shape, e.g. NCHW logits / 0-1 targets."""
    assert inputs.shape == targets.shape
    n = int(inputs.size)

    x_flat = inputs.reshape(-1)
    t_flat = targets.reshape(-1)

    rows = n // _LANES                 # complete 128-lane rows
    use_kernel = rows >= 8             # tiny inputs: plain jnp is cheaper
    n_bulk = rows * _LANES if use_kernel else 0
    kernel_sum = jnp.float32(0.0)

    if use_kernel:
        itemsize = max(inputs.dtype.itemsize, targets.dtype.itemsize)
        budget_rows = max(8, (block_bytes // (_LANES * itemsize)) // 8 * 8)
        tile_rows = min(budget_rows, (rows // 8) * 8)   # multiple of 8, <= rows

        n_blocks = -(-rows // tile_rows)
        ncores = _MAX_CORES if n_blocks >= _MAX_CORES else 1
        blocks_per_core = -(-n_blocks // ncores)
        has_extra = ncores * blocks_per_core > n_blocks   # at most 1 extra blk
        last_rows = rows - (n_blocks - 1) * tile_rows

        if n_bulk == n:
            x2 = x_flat.reshape(rows, _LANES)              # zero-copy bitcast
            t2 = t_flat.reshape(rows, _LANES)
        else:
            # Lane-ragged input: process only the aligned bulk in the kernel;
            # the <128-element tail is handled below with plain jnp (no
            # full-array pad copy).
            x2 = x_flat[:n_bulk].reshape(rows, _LANES)
            t2 = t_flat[:n_bulk].reshape(rows, _LANES)

        if has_extra:
            last_blk = n_blocks - 1
            # Clamp the one out-of-range block index so its DMA stays
            # in-bounds; the kernel skips accumulating it.
            in_map = lambda p, i: (jnp.minimum(p * blocks_per_core + i,
                                               last_blk), 0)
        else:
            in_map = lambda p, i: (p * blocks_per_core + i, 0)

        kernel = functools.partial(
            _focal_kernel, alpha=float(alpha), gamma=gamma,
            tile_rows=tile_rows, blocks_per_core=blocks_per_core,
            n_blocks=n_blocks, last_rows=last_rows, has_extra=has_extra)

        cost = pl.CostEstimate(
            flops=12 * n_bulk,
            transcendentals=3 * n_bulk,
            bytes_accessed=n_bulk * (inputs.dtype.itemsize
                                     + targets.dtype.itemsize)
                           + ncores * _LANES * 4)

        partials = pl.pallas_call(
            kernel,
            out_shape=jax.ShapeDtypeStruct((ncores, _LANES), jnp.float32),
            grid_spec=pltpu.PrefetchScalarGridSpec(
                num_scalar_prefetch=0,
                grid=(ncores, blocks_per_core),
                in_specs=[
                    pl.BlockSpec((tile_rows, _LANES), in_map),
                    pl.BlockSpec((tile_rows, _LANES), in_map),
                ],
                out_specs=pl.BlockSpec((1, _LANES), lambda p, i: (p, 0)),
                scratch_shapes=[pltpu.VMEM((8, _LANES), jnp.float32)],
            ),
            compiler_params=pltpu.CompilerParams(
                # core axis parallel (v7x megacore split), block axis reduction
                dimension_semantics=("parallel", "arbitrary"),
                vmem_limit_bytes=_VMEM_LIMIT,
            ),
            cost_estimate=cost,
        )(x2, t2)
        kernel_sum = jnp.sum(partials)

    tail_sum = jnp.float32(0.0)
    if n_bulk < n:
        tail_sum = _focal_sum_jnp(x_flat[n_bulk:], t_flat[n_bulk:], alpha, gamma)

    return (kernel_sum + tail_sum) / jnp.float32(n)


def _reference(inputs, targets, alpha=ALPHA, gamma=GAMMA):
    x = inputs.astype(jnp.float32)
    t = targets.astype(jnp.float32)
    bce = jnp.maximum(x, 0.0) - x * t + jnp.log1p(jnp.exp(-jnp.abs(x)))
    at = jnp.where(t.astype(jnp.int32) == 0, alpha, 1.0 - alpha)
    pt = jnp.exp(-bce)
    return jnp.mean(at * (1.0 - pt) ** gamma * bce)


if __name__ == "__main__":
    key = jax.random.PRNGKey(0)
    k1, k2, k3, k4, k5, k6 = jax.random.split(key, 6)

    # The kernel uses an approximate (EUP) reciprocal for pt, so compare with
    # a slightly loose rtol; structural errors would be orders of magnitude off.
    RTOL, ATOL = 2e-2, 1e-5

    # NCHW, matches typical segmentation-logit use (aligned fast path).
    B, C, H, W = 2, 4, 16, 16
    logits = jax.random.normal(k1, (B, C, H, W), dtype=jnp.float32)
    targets = jax.random.bernoulli(k2, 0.3, (B, C, H, W)).astype(jnp.float32)
    loss = weighted_focal_loss(logits, targets)
    jax.block_until_ready(loss)
    ref = _reference(logits, targets)
    assert jnp.allclose(loss, ref, rtol=RTOL, atol=ATOL), (loss, ref)

    # Unaligned shape: exercises ragged last block + jnp lane tail.
    shape2 = (3, 5, 7, 11)
    logits2 = jax.random.normal(k3, shape2, dtype=jnp.float32)
    targets2 = jax.random.bernoulli(k4, 0.5, shape2).astype(jnp.float32)
    loss2 = weighted_focal_loss(logits2, targets2)
    jax.block_until_ready(loss2)
    ref2 = _reference(logits2, targets2)
    assert jnp.allclose(loss2, ref2, rtol=RTOL, atol=ATOL), (loss2, ref2)

    # Odd block count with a tiny block budget: exercises the 2-core split,
    # the clamped extra block, the ragged last block and the lane tail.
    shape3 = (2, 4, 41, 129)
    logits3 = jax.random.normal(k5, shape3, dtype=jnp.float32)
    targets3 = jax.random.bernoulli(k6, 0.4, shape3).astype(jnp.float32)
    loss3 = weighted_focal_loss(logits3, targets3, block_bytes=64 * 1024)
    jax.block_until_ready(loss3)
    ref3 = _reference(logits3, targets3)
    assert jnp.allclose(loss3, ref3, rtol=RTOL, atol=ATOL), (loss3, ref3)

    print("KERNEL_OK")
</pallas_src>

<mosaic_0001>
module attributes {stable_mosaic.version = 11 : i64} {
  func.func @_focal_kernel(%arg0: i32, %arg1: i32, %arg2: memref<16x128xf32, #tpu.memory_space<vmem>>, %arg3: memref<16x128xf32, #tpu.memory_space<vmem>>, %arg4: memref<1x128xf32, #tpu.memory_space<vmem>>, %arg5: memref<8x128xf32, #tpu.memory_space<vmem>>) attributes {dimension_semantics = [#tpu.dimension_semantics<parallel>, #tpu.dimension_semantics<arbitrary>], iteration_bounds = array<i64: 1, 1>, scalar_prefetch = 0 : i64, scratch_operands = 1 : i64, tpu.core_type = #tpu.core_type<tc>, window_params = [{transform_indices = @transform_0, window_bounds = array<i64: 16, 128>}, {transform_indices = @transform_1, window_bounds = array<i64: 16, 128>}, {transform_indices = @transform_2, window_bounds = array<i64: 1, 128>}]} {
    %c0_i32 = arith.constant 0 : i32
    %0 = arith.cmpi eq, %arg1, %c0_i32 : i32
    %1 = arith.extui %0 : i1 to i32
    %c0_i32_0 = arith.constant 0 : i32
    %2 = arith.cmpi ne, %1, %c0_i32_0 : i32
    scf.if %2 {
      %cst_19 = arith.constant 0.000000e+00 : f32
      %41 = vector.broadcast %cst_19 : f32 to vector<8x128xf32>
      %c0_20 = arith.constant 0 : index
      %c0_21 = arith.constant 0 : index
      %42 = vector.load %arg5[%c0_20, %c0_21] : memref<8x128xf32, #tpu.memory_space<vmem>>, vector<8x128xf32>
      tpu.vector_store %arg5[%c0_20, %c0_21], %41 {strides = array<i32>} : memref<8x128xf32, #tpu.memory_space<vmem>>, vector<8x128xf32>,
    } else {
    }
    %c0 = arith.constant 0 : index
    %c0_1 = arith.constant 0 : index
    %3 = vector.load %arg2[%c0, %c0_1] : memref<16x128xf32, #tpu.memory_space<vmem>>, vector<16x128xf32>
    %c0_2 = arith.constant 0 : index
    %c0_3 = arith.constant 0 : index
    %4 = vector.load %arg3[%c0_2, %c0_3] : memref<16x128xf32, #tpu.memory_space<vmem>>, vector<16x128xf32>
    %5 = math.absf %3 : vector<16x128xf32>
    %cst = arith.constant 0.000000e+00 : f32
    %6 = vector.broadcast %cst : f32 to vector<16x128xf32>
    %7 = arith.subf %6, %5 : vector<16x128xf32>
    %8 = math.exp %7 : vector<16x128xf32>
    %cst_4 = arith.constant 0.000000e+00 : f32
    %9 = vector.broadcast %cst_4 : f32 to vector<16x128xf32>
    %10 = arith.maximumf %3, %9 : vector<16x128xf32>
    %11 = arith.mulf %3, %4 : vector<16x128xf32>
    %12 = arith.subf %10, %11 : vector<16x128xf32>
    %13 = math.log1p %8 : vector<16x128xf32>
    %14 = arith.addf %12, %13 : vector<16x128xf32>
    %cst_5 = arith.constant 0.000000e+00 : f32
    %15 = vector.broadcast %cst_5 : f32 to vector<16x128xf32>
    %16 = arith.cmpf oeq, %4, %15 : vector<16x128xf32>
    %cst_6 = arith.constant 2.500000e-01 : f32
    %cst_7 = arith.constant 7.500000e-01 : f32
    %17 = vector.broadcast %cst_6 : f32 to vector<16x128xf32>
    %18 = vector.broadcast %cst_7 : f32 to vector<16x128xf32>
    %19 = arith.select %16, %17, %18 : vector<16x128xi1>, vector<16x128xf32>
    %cst_8 = arith.constant 0.000000e+00 : f32
    %20 = vector.broadcast %cst_8 : f32 to vector<16x128xf32>
    %21 = arith.cmpf ogt, %12, %20 : vector<16x128xf32>
    %cst_9 = arith.constant 1.000000e+00 : f32
    %22 = vector.broadcast %cst_9 : f32 to vector<16x128xf32>
    %23 = arith.select %21, %8, %22 : vector<16x128xi1>, vector<16x128xf32>
    %cst_10 = arith.constant 1.000000e+00 : f32
    %24 = vector.broadcast %cst_10 : f32 to vector<16x128xf32>
    %25 = arith.addf %24, %8 : vector<16x128xf32>
    %26 = tpu.reciprocal %25 {approx = true} : vector<16x128xf32> -> vector<16x128xf32>
    %27 = arith.mulf %23, %26 : vector<16x128xf32>
    %cst_11 = arith.constant 1.000000e+00 : f32
    %28 = vector.broadcast %cst_11 : f32 to vector<16x128xf32>
    %29 = arith.subf %28, %27 : vector<16x128xf32>
    %30 = arith.mulf %29, %29 : vector<16x128xf32>
    %31 = arith.mulf %19, %30 : vector<16x128xf32>
    %32 = arith.mulf %31, %14 : vector<16x128xf32>
    %c0_12 = arith.constant 0 : index
    %c0_13 = arith.constant 0 : index
    %33 = vector.load %arg5[%c0_12, %c0_13] : memref<8x128xf32, #tpu.memory_space<vmem>>, vector<8x128xf32>
    %34 = vector.shape_cast %32 : vector<16x128xf32> to vector<2x8x128xf32>
    %cst_14 = arith.constant dense<0.000000e+00> : vector<8x128xf32>
    %35 = vector.multi_reduction <add>, %34, %cst_14 [0] : vector<2x8x128xf32> to vector<8x128xf32>
    %36 = arith.addf %33, %35 : vector<8x128xf32>
    %c0_15 = arith.constant 0 : index
    %c0_16 = arith.constant 0 : index
    %37 = vector.load %arg5[%c0_15, %c0_16] : memref<8x128xf32, #tpu.memory_space<vmem>>, vector<8x128xf32>
    tpu.vector_store %arg5[%c0_15, %c0_16], %36 {strides = array<i32>} : memref<8x128xf32, #tpu.memory_space<vmem>>, vector<8x128xf32>,
    %c0_i32_17 = arith.constant 0 : i32
    %38 = arith.cmpi eq, %arg1, %c0_i32_17 : i32
    %39 = arith.extui %38 : i1 to i32
    %c0_i32_18 = arith.constant 0 : i32
    %40 = arith.cmpi ne, %39, %c0_i32_18 : i32
    scf.if %40 {
      %c0_19 = arith.constant 0 : index
      %c0_20 = arith.constant 0 : index
      %41 = vector.load %arg5[%c0_19, %c0_20] : memref<8x128xf32, #tpu.memory_space<vmem>>, vector<8x128xf32>
      %cst_21 = arith.constant dense<0.000000e+00> : vector<128xf32>
      %42 = vector.multi_reduction <add>, %41, %cst_21 [0] : vector<8x128xf32> to vector<128xf32>
      %43 = vector.shape_cast %42 : vector<128xf32> to vector<1x128xf32>
      %c0_22 = arith.constant 0 : index
      %c0_23 = arith.constant 0 : index
      %44 = vector.load %arg4[%c0_22, %c0_23] : memref<1x128xf32, #tpu.memory_space<vmem>>, vector<1x128xf32>
      tpu.vector_store %arg4[%c0_22, %c0_23], %43 {strides = array<i32>} : memref<1x128xf32, #tpu.memory_space<vmem>>, vector<1x128xf32>,
    } else {
    }
    return
  }
  func.func @transform_0(%arg0: i32, %arg1: i32) -> (i32, i32) {
    %c1_i32 = arith.constant 1 : i32
    %0 = arith.muli %arg0, %c1_i32 : i32
    %1 = arith.addi %0, %arg1 : i32
    %c0_i32 = arith.constant 0 : i32
    %c0_i32_0 = arith.constant 0 : i32
    return %1, %c0_i32 : i32, i32
  }
  func.func @transform_1(%arg0: i32, %arg1: i32) -> (i32, i32) {
    %c1_i32 = arith.constant 1 : i32
    %0 = arith.muli %arg0, %c1_i32 : i32
    %1 = arith.addi %0, %arg1 : i32
    %c0_i32 = arith.constant 0 : i32
    %c0_i32_0 = arith.constant 0 : i32
    return %1, %c0_i32 : i32, i32
  }
  func.func @transform_2(%arg0: i32, %arg1: i32) -> (i32, i32) {
    %c0_i32 = arith.constant 0 : i32
    %c0_i32_0 = arith.constant 0 : i32
    return %arg0, %c0_i32 : i32, i32
  }
}

</mosaic_0001>

<llo_original>
// kernel: tpu_custom_call.1
$region0: #{tpu_custom_call.1}
  #allocation0 [shape = 'u32[]', space=smem, size = 0x4, offset = 0x4, fixed_abs, tag = 'smem constant byte address 0x4 - core index']
  #allocation1 [shape = 'u32[144,128]{1,0:T(1,128)}', space=vmem, size = 0x12000, scoped, tag = 'internal scratch']
  #allocation2 [shape = 'f32[8,128]{1,0:T(8,128)}', space=vmem, size = 0x1000, scoped, tag = 'scratch operand']
  %s0 = inlined_call_operand.hbm [shape: f32[16,128], index: 0, kind: input, shape index: {}]
  %s1 = inlined_call_operand.hbm [shape: f32[16,128], index: 1, kind: input, shape index: {}]
  %s2 = inlined_call_operand.hbm [shape: f32[1,128], index: 2, kind: output, shape index: {}]
  %s3 = sld [smem:[#allocation0]]
  $region34: #{tpu_custom_call.1} parent=0
    _
  %s5 = ssub.s32 1, %s3
  %s6 = scalar_select 0, %s5, %s3
  $region1: #{tpu_custom_call.1} parent=0
    #allocation3 [shape = 'u8[8192]{0}', space=vmem, size = 0x2000, scoped, tag = 'input window, operand 0, single buffered']
    #allocation4 [shape = 's32[1]{0}', space=sflag, size = 0x4, scoped, tag = 'scoped memory for tpu_custom_call.1']
    #allocation5 [shape = 's32[1]{0}', space=sflag, size = 0x4, scoped, tag = 'scoped memory for tpu_custom_call.1']
    #allocation6 [shape = 'u8[8192]{0}', space=vmem, size = 0x2000, scoped, tag = 'input window, operand 1, single buffered']
    #allocation7 [shape = 's32[1]{0}', space=sflag, size = 0x4, scoped, tag = 'scoped memory for tpu_custom_call.1']
    #allocation8 [shape = 'u8[512]{0}', space=vmem, size = 0x400, scoped, tag = 'output window, operand 0, single buffered']
    %7 = vsyncpa [#allocation4], 0
    %8 = vsyncpa [#allocation7], 0
    %9 = vsyncpa [#allocation5], 0
    // Predicated region
    $region2: #{tpu_custom_call.1} parent=1 // pred_check
      _
    $region3: #{tpu_custom_call.1} parent=1 // pred_check_branch
      %11 = sbr.rel (0) target = $region5
    $region4: #{tpu_custom_call.1} parent=1 // pred_region
      %s12 = sadd.s32 0, 0
      %s13 = smul.u32 2, %s12
      %s15 = ssub.s32 256, 256
      %16 = vsyncadd [#allocation4], %s15
      %s17 = smul.addr %s13, 128
      %s18 = scalar_lea.hbm %s0, %s17
      %s19 = sshll.u32 [#allocation3], 4
      %s20 = int_to_ptr.vmem [resolvable:$true] %s19
      %25 = dma.hbm_to_vmem [thread:$0]  %s18, 256, %s20, [#allocation4], 128, 128, 8
    $region5: #{tpu_custom_call.1} parent=1 // pred_fallthru
      _
    // Predicated region
    $region6: #{tpu_custom_call.1} parent=1 // pred_check
      _
    $region7: #{tpu_custom_call.1} parent=1 // pred_check_branch
      %27 = sbr.rel (0) target = $region9
    $region8: #{tpu_custom_call.1} parent=1 // pred_region
      %s28 = sadd.s32 0, 0
      %s29 = smul.u32 2, %s28
      %s31 = ssub.s32 256, 256
      %32 = vsyncadd [#allocation7], %s31
      %s33 = smul.addr %s29, 128
      %s34 = scalar_lea.hbm %s1, %s33
      %s35 = sshll.u32 [#allocation6], 4
      %s36 = int_to_ptr.vmem [resolvable:$true] %s35
      %41 = dma.hbm_to_vmem [thread:$0]  %s34, 256, %s36, [#allocation7], 128, 128, 8
    $region9: #{tpu_custom_call.1} parent=1 // pred_fallthru
      _
    // Predicated region
    $region10: #{tpu_custom_call.1} parent=1 // pred_check
      _
    $region11: #{tpu_custom_call.1} parent=1 // pred_check_branch
      %43 = sbr.rel (0) target = $region13
    $region12: #{tpu_custom_call.1} parent=1 // pred_region
      %44 = dma.done [#allocation4], 256
    $region13: #{tpu_custom_call.1} parent=1 // pred_fallthru
      _
    // Predicated region
    $region14: #{tpu_custom_call.1} parent=1 // pred_check
      _
    $region15: #{tpu_custom_call.1} parent=1 // pred_check_branch
      %46 = sbr.rel (0) target = $region17
    $region16: #{tpu_custom_call.1} parent=1 // pred_region
      %47 = dma.done [#allocation7], 256
    $region17: #{tpu_custom_call.1} parent=1 // pred_fallthru
      _
    %s48 = sadd.s32 0, 0
    %s49 = smul.u32 2, %s48
    %s50 = sadd.s32 0, 0
    %s51 = smul.u32 2, %s50
    %p52 = scmp.eq.s32.totalorder 0, 0
    // Predicated region
    $region18: #{tpu_custom_call.1} parent=1 // pred_check
      %p53 = pneg %p52
    $region19: #{tpu_custom_call.1} parent=1 // pred_check_branch
      %55 = sbr.rel (%p53) target = $region21
    $region20: #{tpu_custom_call.1} parent=1 // pred_region
      %56 = vst [vmem:[#allocation2] sm:$0xff] 0.0
    $region21: #{tpu_custom_call.1} parent=1 // pred_fallthru
      _
    %v57 = vld [vmem:[#allocation3] sm:$0xff]
    %v58 = vld [vmem:[#allocation3 + $0x8] sm:$0xff]
    %v59 = vld [vmem:[#allocation6] sm:$0xff]
    %v60 = vld [vmem:[#allocation6 + $0x8] sm:$0xff]
    %v61 = vand.u32 2147483647, %v57
    %v62 = vand.u32 2147483647, %v58
    %v63 = vsub.f32 0.0, %v61
    %v64 = vsub.f32 0.0, %v62
    %v65 = vmul.f32 %v63, 1.442695
    %v66 = vpow.pop %v65
    %v67 = vmul.f32 %v64, 1.442695
    %v68 = vpow.pop %v67
    %v69 = vmax.f32 %v57, 0.0
    %v70 = vmax.f32 %v58, 0.0
    %v71 = vmul.f32 %v57, %v59
    %v72 = vmul.f32 %v58, %v60
    %v73 = vsub.f32 %v69, %v71
    %v74 = vsub.f32 %v70, %v72
    %v75 = vadd.f32 %v66, 1.0
    %v76 = vlog2.pop %v75
    %v77 = vmul.f32 %v76, 0.6931472
    %v78 = vmul.f32 -0.5, %v66
    %v79 = vadd.f32 %v78, 1.0
    %v80 = vmul.f32 %v79, %v66
    %v81 = vand.u32 2147483647, %v66
    %vm82 = vcmp.lt.f32.partialorder %v81, 0.0004427343
    %v83 = vsel %vm82, %v80, %v77
    %v84 = vadd.f32 %v68, 1.0
    %v85 = vlog2.pop %v84
    %v86 = vmul.f32 %v85, 0.6931472
    %v87 = vmul.f32 -0.5, %v68
    %v88 = vadd.f32 %v87, 1.0
    %v89 = vmul.f32 %v88, %v68
    %v90 = vand.u32 2147483647, %v68
    %vm91 = vcmp.lt.f32.partialorder %v90, 0.0004427343
    %v92 = vsel %vm91, %v89, %v86
    %v93 = vadd.f32 %v73, %v83
    %v94 = vadd.f32 %v74, %v92
    %vm95 = vcmp.eq.f32.partialorder %v59, 0.0
    %vm96 = vcmp.eq.f32.partialorder %v60, 0.0
    %v97 = vsel %vm95, 0.25, 0.75
    %v98 = vsel %vm96, 0.25, 0.75
    %vm99 = vcmp.gt.f32.partialorder %v73, 0.0
    %vm100 = vcmp.gt.f32.partialorder %v74, 0.0
    %v101 = vsel %vm99, %v66, 1.0
    %v102 = vsel %vm100, %v68, 1.0
    %v103 = vadd.f32 %v66, 1.0
    %v104 = vadd.f32 %v68, 1.0
    %v105 = vrcp.pop %v103
    %v106 = vrcp.pop %v104
    %v107 = vmul.f32 %v101, %v105
    %v108 = vmul.f32 %v102, %v106
    %v109 = vsub.f32 1.0, %v107
    %v110 = vsub.f32 1.0, %v108
    %v111 = vmul.f32 %v109, %v109
    %v112 = vmul.f32 %v110, %v110
    %v113 = vmul.f32 %v97, %v111
    %v114 = vmul.f32 %v98, %v112
    %v115 = vmul.f32 %v113, %v93
    %v116 = vmul.f32 %v114, %v94
    %v117 = vld [vmem:[#allocation2] sm:$0xff]
    %v118 = vadd.f32 %v115, %v116
    %v119 = vadd.f32 %v117, %v118
    %120 = vst [vmem:[#allocation2] sm:$0xff] %v119
    // Predicated region
    $region22: #{tpu_custom_call.1} parent=1 // pred_check
      %p121 = pneg %p52
    $region23: #{tpu_custom_call.1} parent=1 // pred_check_branch
      %123 = sbr.rel (%p121) target = $region25
    $region24: #{tpu_custom_call.1} parent=1 // pred_region
      %v124 = vld [vmem:[#allocation2] sm:$0xff]
      %v125 = vrot.slane %v124, 4
      %v126 = vadd.f32 %v124, %v125
      %v127 = vrot.slane %v126, 2
      %v128 = vadd.f32 %v126, %v127
      %v129 = vrot.slane %v128, 1
      %v130 = vadd.f32 %v128, %v129
      %131 = vst [vmem:[#allocation8] sm:$0x1] %v130
    $region25: #{tpu_custom_call.1} parent=1 // pred_fallthru
      _
    // Predicated region
    $region26: #{tpu_custom_call.1} parent=1 // pred_check
      _
    $region27: #{tpu_custom_call.1} parent=1 // pred_check_branch
      %133 = sbr.rel (0) target = $region29
    $region28: #{tpu_custom_call.1} parent=1 // pred_region
      %s135 = ssub.s32 16, 16
      %136 = vsyncadd [#allocation5], %s135
      %s138 = sshll.u32 [#allocation8], 4
      %s139 = int_to_ptr.vmem [resolvable:$true] %s138
      %141 = dma.vmem_to_hbm [thread:$0]  %s139, 16, %s2, [#allocation5]
    $region29: #{tpu_custom_call.1} parent=1 // pred_fallthru
      _
    // Predicated region
    $region30: #{tpu_custom_call.1} parent=1 // pred_check
      _
    $region31: #{tpu_custom_call.1} parent=1 // pred_check_branch
      %143 = sbr.rel (0) target = $region33
    $region32: #{tpu_custom_call.1} parent=1 // pred_region
      %144 = dma.done [#allocation5], 16
    $region33: #{tpu_custom_call.1} parent=1 // pred_fallthru
      _
    %145 = vsyncpa [#allocation4], 1
    %146 = vsyncpa [#allocation7], 1
    %147 = vsyncpa [#allocation5], 1

</llo_original>
